<compile_context>
chip_gen: v7x
topology: tpu7x:2x2x1
jax: 0.10.0
libtpu: 0.0.40
codegen_flags: <defaults>
</compile_context>

<pallas_src>
import jax
import jax.numpy as jnp
from jax.experimental import pallas as pl
from jax.experimental.pallas import tpu as pltpu

# ---------------------------------------------------------------------------
# Model dimensions (small stand-in shapes, consistent with the forward pass)
# ---------------------------------------------------------------------------
N_BATCH = 2
C_IN = 4
H_IN = W_IN = 16
C_STEM = 8                 # per-backbone stem / depthwise channels
C_OUT = 16                 # per-backbone pointwise-projection channels
NUM_CLASSES = 128
H_FEAT = W_FEAT = 8        # spatial size after the stride-2 stem

C2S = 2 * C_STEM           # merged (effnet || mobilenet) stem channels  = 16
K2 = 2 * NUM_CLASSES       # merged logits                               = 256
ROWS = N_BATCH * H_FEAT    # feature-slab sublanes                       = 16
LANES = W_FEAT * C2S       # feature-slab lanes (lane = j*C2S + c)       = 128
KIN = 3 * (W_IN + 2) * C_IN  # im2col feature count                      = 216


# ---------------------------------------------------------------------------
# Fused Pallas kernel
# ---------------------------------------------------------------------------
def _softmax_rows(logits):
  """Stable row softmax; EUP approx reciprocal + one Newton refinement."""
  l = logits - jnp.max(logits, axis=-1, keepdims=True)
  e = jnp.exp(l)
  s = jnp.sum(e, axis=-1, keepdims=True)
  r = pl.reciprocal(s, approx=True)
  r = r * (2.0 - s * r)              # Newton step -> ~f32-exact
  return e * r


def fused_combined_kernel(im2col_ref, w_stem_ref, stem_b_ref, dw_ref, dw_b_ref,
                          w_cls_ref, b_cls_ref, out_ref):
  # Lane / row structure masks: computed ONCE and reused (JAX does not CSE
  # broadcast_in_dim, so hoist the iotas).
  l_idx = jax.lax.broadcasted_iota(jnp.int32, (ROWS, LANES), 1)
  r_idx = jax.lax.broadcasted_iota(jnp.int32, (ROWS, LANES), 0)
  eff_lane = (l_idx % C2S) < C_STEM              # SiLU (EfficientNet) lanes
  i_pos = r_idx % H_FEAT
  row_ok_m1 = i_pos >= 1                         # reading row i-1 is valid
  row_ok_p1 = i_pos <= H_FEAT - 2                # reading row i+1 is valid
  lane_ok_m1 = l_idx >= C2S                      # reading col j-1 is valid
  lane_ok_p1 = l_idx < (W_FEAT - 1) * C2S        # reading col j+1 is valid

  def dual_act(v):
    # SiLU on EfficientNet lanes, ReLU6 on MobileNetV2 lanes (f32 VPU/EUP).
    return jnp.where(eff_lane, v * jax.nn.sigmoid(v), jnp.clip(v, 0.0, 6.0))

  # ----- stem: 3x3/stride-2/pad-1 conv of both backbones as ONE MXU GEMM ----
  # im2col: [16, 216] bf16, structured weight: [216, 128] bf16 -> the result
  # is already the lane-dense feature slab [ROWS=16, LANES=128], lane = j*16+c.
  acc = jnp.dot(im2col_ref[...], w_stem_ref[...],
                preferred_element_type=jnp.float32)
  h = dual_act(acc + stem_b_ref[...])                       # [16, 128] f32

  # ----- depthwise 3x3 / stride-1 / pad-1 on the lane-dense slab ------------
  # W-shifts: XLU lane rolls by +/-C2S with hoisted lane masks (zero pad).
  # H-shifts: sublane slices + one zero row; n-boundary rows masked.
  zero_row = jnp.zeros((1, LANES), jnp.float32)
  lane_taps = (
      jnp.where(lane_ok_m1, pltpu.roll(h, C2S, axis=1), 0.0),           # dj=0
      h,                                                                # dj=1
      jnp.where(lane_ok_p1, pltpu.roll(h, LANES - C2S, axis=1), 0.0),   # dj=2
  )
  dw = dw_ref[...]                                          # [9, 128] f32
  acc2 = jnp.zeros((ROWS, LANES), jnp.float32)
  for di in range(3):
    for dj in range(3):
      v = lane_taps[dj]
      if di == 0:      # tap reads row i-1
        v = jnp.concatenate([zero_row, v[:ROWS - 1]], axis=0)
        v = jnp.where(row_ok_m1, v, 0.0)
      elif di == 2:    # tap reads row i+1
        v = jnp.concatenate([v[1:], zero_row], axis=0)
        v = jnp.where(row_ok_p1, v, 0.0)
      t = di * 3 + dj
      acc2 = acc2 + v * dw[t:t + 1, :]
  h2 = dual_act(acc2 + dw_b_ref[...])                       # [16, 128] f32

  # ----- GAP folded into (pointwise @ classifier): one bf16 MXU GEMM --------
  rs = jnp.concatenate(
      [jnp.sum(h2[n * H_FEAT:(n + 1) * H_FEAT], axis=0, keepdims=True)
       for n in range(N_BATCH)], axis=0)                    # [N, 128] f32
  logits = jnp.dot(rs.astype(jnp.bfloat16), w_cls_ref[...],
                   preferred_element_type=jnp.float32) + b_cls_ref[...]  # [N,256]

  # ----- CombinedModel.forward: softmax each backbone's logits, average -----
  p_eff = _softmax_rows(logits[:, :NUM_CLASSES])
  p_mob = _softmax_rows(logits[:, NUM_CLASSES:])
  out_ref[...] = (p_eff + p_mob) * 0.5


# ---------------------------------------------------------------------------
# Wrapper (single grid-free pallas_call, whole-array VMEM blocks)
# ---------------------------------------------------------------------------
_VMEM = pl.BlockSpec(memory_space=pltpu.MemorySpace.VMEM)


@jax.jit
def combined_model_forward(x_nchw, merged):
  # NCHW -> NHWC -> zero-pad -> im2col [N*H_FEAT, 216].  Pure layout plumbing
  # on the 4 KB input; all compute runs inside the kernel.
  x = jnp.transpose(x_nchw, (0, 2, 3, 1)).astype(jnp.float32)
  xp = jnp.pad(x, ((0, 0), (1, 1), (1, 1), (0, 0)))                 # [N,18,18,C]
  row_idx = (2 * jnp.arange(H_FEAT)[:, None] + jnp.arange(3)[None, :]).reshape(-1)
  g = xp[:, row_idx, :, :]                                          # [N,24,18,C]
  im2col = g.reshape(ROWS, KIN).astype(jnp.bfloat16)                # [16, 216]

  args = (im2col, merged["w_stem"], merged["stem_b"], merged["dw"],
          merged["dw_b"], merged["w_cls"], merged["b_cls"])
  return pl.pallas_call(
      fused_combined_kernel,
      out_shape=jax.ShapeDtypeStruct((N_BATCH, NUM_CLASSES), jnp.float32),
      in_specs=[_VMEM] * len(args),
      out_specs=_VMEM,
      cost_estimate=pl.CostEstimate(
          flops=1_100_000, transcendentals=5_000, bytes_accessed=140_000),
  )(*args)


# ---------------------------------------------------------------------------
# Parameters: per-backbone init, then merge/fold for the fused kernel
# ---------------------------------------------------------------------------
def init_backbone_params(key, cin, c_stem, c_out, num_classes):
  ks = jax.random.split(key, 8)
  s = 0.1
  return {
      "stem_w": s * jax.random.normal(ks[0], (3, 3, cin, c_stem), jnp.float32),
      "stem_b": s * jax.random.normal(ks[1], (c_stem,), jnp.float32),
      "dw_w":   s * jax.random.normal(ks[2], (3, 3, c_stem), jnp.float32),
      "dw_b":   s * jax.random.normal(ks[3], (c_stem,), jnp.float32),
      "pw_w":   s * jax.random.normal(ks[4], (c_stem, c_out), jnp.float32),
      "pw_b":   s * jax.random.normal(ks[5], (c_out,), jnp.float32),
      "fc_w":   s * jax.random.normal(ks[6], (c_out, num_classes), jnp.float32),
      "fc_b":   s * jax.random.normal(ks[7], (num_classes,), jnp.float32),
  }


def merge_backbone_params(eff, mob):
  """Lane-concatenate the two backbones and pre-fold weights for the kernel:
  * stem conv  -> structured GEMM weight [216, 128] (output is the lane-dense
    slab, lane = j*C2S + c, effnet channels first),
  * depthwise  -> per-tap weights tiled over the 8 j lane-groups [9, 128],
  * GAP + pointwise (linear bottleneck) + classifier -> one GEMM [128, 256]."""
  cs, k = C_STEM, NUM_CLASSES

  # ---- stem: Toeplitz / block-structured GEMM weight ----
  stem_w = jnp.concatenate([eff["stem_w"], mob["stem_w"]], axis=-1)  # [3,3,4,16]
  w_stem = jnp.zeros((KIN, LANES), jnp.float32)
  for di in range(3):
    for dj in range(3):
      for j in range(W_FEAT):
        wp = 2 * j + dj                                # padded input column
        r0 = (di * (W_IN + 2) + wp) * C_IN
        w_stem = w_stem.at[r0:r0 + C_IN, j * C2S:(j + 1) * C2S].set(stem_w[di, dj])
  stem_b = jnp.tile(jnp.concatenate([eff["stem_b"], mob["stem_b"]]),
                    W_FEAT).reshape(1, LANES)

  # ---- depthwise: per-tap channel weights, tiled over the j lane groups ----
  dw9 = jnp.concatenate([eff["dw_w"], mob["dw_w"]], axis=-1).reshape(9, C2S)
  dw = jnp.tile(dw9, (1, W_FEAT))                                  # [9, 128]
  dw_b = jnp.tile(jnp.concatenate([eff["dw_b"], mob["dw_b"]]),
                  W_FEAT).reshape(1, LANES)

  # ---- GAP + pointwise + classifier folded into one GEMM (exact: there is
  #      no nonlinearity between the linear bottleneck and the head) ----
  w_comb = jnp.zeros((C2S, K2), jnp.float32)
  w_comb = w_comb.at[:cs, :k].set(eff["pw_w"] @ eff["fc_w"])
  w_comb = w_comb.at[cs:, k:].set(mob["pw_w"] @ mob["fc_w"])
  w_cls = (jnp.tile(w_comb, (W_FEAT, 1)) / float(H_FEAT * W_FEAT))  # [128,256]
  b_cls = jnp.concatenate([eff["pw_b"] @ eff["fc_w"] + eff["fc_b"],
                           mob["pw_b"] @ mob["fc_w"] + mob["fc_b"]]).reshape(1, K2)

  return {
      "w_stem": w_stem.astype(jnp.bfloat16),   # bf16 MXU inputs, f32 accum
      "stem_b": stem_b,
      "dw": dw, "dw_b": dw_b,                  # f32 VPU path (v5e-safe)
      "w_cls": w_cls.astype(jnp.bfloat16),
      "b_cls": b_cls,
  }


# ---------------------------------------------------------------------------
# Pure-JAX f32 reference of the identical math (self-check only)
# ---------------------------------------------------------------------------
def _backbone_ref(x_nhwc, p, act):
  n = x_nhwc.shape[0]
  cs = p["stem_b"].shape[0]
  xp = jnp.pad(x_nhwc, ((0, 0), (1, 1), (1, 1), (0, 0)))
  acc = jnp.zeros((n, H_FEAT, W_FEAT, cs), jnp.float32) + p["stem_b"]
  for di in range(3):
    for dj in range(3):
      tap = xp[:, di:di + 2 * H_FEAT:2, dj:dj + 2 * W_FEAT:2, :]
      acc = acc + jnp.einsum("nhwc,co->nhwo", tap, p["stem_w"][di, dj])
  h = act(acc)
  hp = jnp.pad(h, ((0, 0), (1, 1), (1, 1), (0, 0)))
  acc2 = jnp.zeros_like(h) + p["dw_b"]
  for di in range(3):
    for dj in range(3):
      acc2 = acc2 + hp[:, di:di + H_FEAT, dj:dj + W_FEAT, :] * p["dw_w"][di, dj]
  h2 = act(acc2)
  pooled = jnp.mean(h2, axis=(1, 2))
  feat = pooled @ p["pw_w"] + p["pw_b"]
  return feat @ p["fc_w"] + p["fc_b"]


def _reference_forward(x_nchw, eff, mob):
  x = jnp.transpose(x_nchw, (0, 2, 3, 1)).astype(jnp.float32)
  silu = lambda v: v * jax.nn.sigmoid(v)
  relu6 = lambda v: jnp.clip(v, 0.0, 6.0)
  logit_e = _backbone_ref(x, eff, silu)
  logit_m = _backbone_ref(x, mob, relu6)
  sm = lambda l: jax.nn.softmax(l, axis=-1)
  return 0.5 * (sm(logit_e) + sm(logit_m))


# ---------------------------------------------------------------------------
if __name__ == "__main__":
  key = jax.random.PRNGKey(0)
  k_x, k_eff, k_mob = jax.random.split(key, 3)

  x = jax.random.normal(k_x, (N_BATCH, C_IN, H_IN, W_IN), jnp.float32)
  eff = init_backbone_params(k_eff, C_IN, C_STEM, C_OUT, NUM_CLASSES)
  mob = init_backbone_params(k_mob, C_IN, C_STEM, C_OUT, NUM_CLASSES)
  merged = merge_backbone_params(eff, mob)

  avg_prob = jax.block_until_ready(combined_model_forward(x, merged))

  assert avg_prob.shape == (N_BATCH, NUM_CLASSES)
  assert bool(jnp.all(jnp.isfinite(avg_prob)))
  row_sums = jnp.sum(avg_prob, axis=1)
  assert bool(jnp.all(jnp.abs(row_sums - 1.0) < 1e-3)), row_sums

  ref = _reference_forward(x, eff, mob)
  max_err = float(jnp.max(jnp.abs(avg_prob - ref)))
  assert max_err < 2e-3, max_err

  print("KERNEL_OK")
</pallas_src>

<mosaic_0001>
module attributes {stable_mosaic.version = 11 : i64} {
  func.func @fused_combined_kernel(%arg0: memref<16x216xbf16, #tpu.memory_space<vmem>>, %arg1: memref<216x128xbf16, #tpu.memory_space<vmem>>, %arg2: memref<1x128xf32, #tpu.memory_space<vmem>>, %arg3: memref<9x128xf32, #tpu.memory_space<vmem>>, %arg4: memref<1x128xf32, #tpu.memory_space<vmem>>, %arg5: memref<128x256xbf16, #tpu.memory_space<vmem>>, %arg6: memref<1x256xf32, #tpu.memory_space<vmem>>, %arg7: memref<2x128xf32, #tpu.memory_space<vmem>>) attributes {dimension_semantics = [], scalar_prefetch = 0 : i64, scratch_operands = 0 : i64, tpu.core_type = #tpu.core_type<tc>} {
    %0 = tpu.iota {dimensions = array<i32: 1>} : vector<16x128xi32>
    %1 = tpu.iota {dimensions = array<i32: 0>} : vector<16x128xi32>
    %c16_i32 = arith.constant 16 : i32
    %c0_i32 = arith.constant 0 : i32
    %2 = arith.cmpi eq, %c16_i32, %c0_i32 : i32
    %c1_i32 = arith.constant 1 : i32
    %3 = arith.select %2, %c1_i32, %c16_i32 : i32
    %4 = vector.broadcast %3 : i32 to vector<16x128xi32>
    %5 = arith.remsi %0, %4 : vector<16x128xi32>
    %c0_i32_0 = arith.constant 0 : i32
    %6 = vector.broadcast %c0_i32_0 : i32 to vector<16x128xi32>
    %7 = arith.cmpi ne, %5, %6 : vector<16x128xi32>
    %c0_i32_1 = arith.constant 0 : i32
    %8 = vector.broadcast %c0_i32_1 : i32 to vector<16x128xi32>
    %9 = arith.cmpi slt, %5, %8 : vector<16x128xi32>
    %c0_i32_2 = arith.constant 0 : i32
    %10 = arith.cmpi slt, %3, %c0_i32_2 : i32
    %11 = vector.broadcast %10 : i1 to vector<16x128xi1>
    %12 = vector.broadcast %11 : vector<16x128xi1> to vector<16x128xi1>
    %13 = arith.xori %9, %12 : vector<16x128xi1>
    %14 = arith.andi %13, %7 : vector<16x128xi1>
    %15 = vector.broadcast %3 : i32 to vector<16x128xi32>
    %16 = arith.addi %5, %15 : vector<16x128xi32>
    %17 = arith.select %14, %16, %5 : vector<16x128xi1>, vector<16x128xi32>
    %c8_i32 = arith.constant 8 : i32
    %18 = vector.broadcast %c8_i32 : i32 to vector<16x128xi32>
    %19 = arith.cmpi slt, %17, %18 : vector<16x128xi32>
    %c8_i32_3 = arith.constant 8 : i32
    %c0_i32_4 = arith.constant 0 : i32
    %20 = arith.cmpi eq, %c8_i32_3, %c0_i32_4 : i32
    %c1_i32_5 = arith.constant 1 : i32
    %21 = arith.select %20, %c1_i32_5, %c8_i32_3 : i32
    %22 = vector.broadcast %21 : i32 to vector<16x128xi32>
    %23 = arith.remsi %1, %22 : vector<16x128xi32>
    %c0_i32_6 = arith.constant 0 : i32
    %24 = vector.broadcast %c0_i32_6 : i32 to vector<16x128xi32>
    %25 = arith.cmpi ne, %23, %24 : vector<16x128xi32>
    %c0_i32_7 = arith.constant 0 : i32
    %26 = vector.broadcast %c0_i32_7 : i32 to vector<16x128xi32>
    %27 = arith.cmpi slt, %23, %26 : vector<16x128xi32>
    %c0_i32_8 = arith.constant 0 : i32
    %28 = arith.cmpi slt, %21, %c0_i32_8 : i32
    %29 = vector.broadcast %28 : i1 to vector<16x128xi1>
    %30 = vector.broadcast %29 : vector<16x128xi1> to vector<16x128xi1>
    %31 = arith.xori %27, %30 : vector<16x128xi1>
    %32 = arith.andi %31, %25 : vector<16x128xi1>
    %33 = vector.broadcast %21 : i32 to vector<16x128xi32>
    %34 = arith.addi %23, %33 : vector<16x128xi32>
    %35 = arith.select %32, %34, %23 : vector<16x128xi1>, vector<16x128xi32>
    %c1_i32_9 = arith.constant 1 : i32
    %36 = vector.broadcast %c1_i32_9 : i32 to vector<16x128xi32>
    %37 = arith.cmpi sge, %35, %36 : vector<16x128xi32>
    %c6_i32 = arith.constant 6 : i32
    %38 = vector.broadcast %c6_i32 : i32 to vector<16x128xi32>
    %39 = arith.cmpi sle, %35, %38 : vector<16x128xi32>
    %c16_i32_10 = arith.constant 16 : i32
    %40 = vector.broadcast %c16_i32_10 : i32 to vector<16x128xi32>
    %41 = arith.cmpi sge, %0, %40 : vector<16x128xi32>
    %c112_i32 = arith.constant 112 : i32
    %42 = vector.broadcast %c112_i32 : i32 to vector<16x128xi32>
    %43 = arith.cmpi slt, %0, %42 : vector<16x128xi32>
    %c0 = arith.constant 0 : index
    %c0_11 = arith.constant 0 : index
    %44 = vector.load %arg0[%c0, %c0_11] : memref<16x216xbf16, #tpu.memory_space<vmem>>, vector<16x216xbf16>
    %c0_12 = arith.constant 0 : index
    %c0_13 = arith.constant 0 : index
    %45 = vector.load %arg1[%c0_12, %c0_13] : memref<216x128xbf16, #tpu.memory_space<vmem>>, vector<216x128xbf16>
    %cst = arith.constant dense<0.000000e+00> : vector<16x128xf32>
    %46 = tpu.matmul %44, %45, %cst {dimension_numbers = #tpu.dot_dimension_numbers<[1], [0], [0], [1], [0, 0, 1, 1], [], []>} : vector<16x216xbf16>, vector<216x128xbf16>, vector<16x128xf32> -> vector<16x128xf32>
    %c0_14 = arith.constant 0 : index
    %c0_15 = arith.constant 0 : index
    %47 = vector.load %arg2[%c0_14, %c0_15] : memref<1x128xf32, #tpu.memory_space<vmem>>, vector<1x128xf32>
    %48 = vector.broadcast %47 : vector<1x128xf32> to vector<16x128xf32>
    %49 = arith.addf %46, %48 : vector<16x128xf32>
    %50 = arith.negf %49 : vector<16x128xf32>
    %51 = math.exp %50 : vector<16x128xf32>
    %cst_16 = arith.constant 1.000000e+00 : f32
    %52 = vector.broadcast %cst_16 : f32 to vector<16x128xf32>
    %53 = arith.addf %52, %51 : vector<16x128xf32>
    %54 = arith.divf %52, %53 : vector<16x128xf32>
    %55 = arith.mulf %49, %54 : vector<16x128xf32>
    %cst_17 = arith.constant 0.000000e+00 : f32
    %cst_18 = arith.constant 6.000000e+00 : f32
    %56 = vector.broadcast %cst_17 : f32 to vector<16x128xf32>
    %57 = arith.maximumf %56, %49 : vector<16x128xf32>
    %58 = vector.broadcast %cst_18 : f32 to vector<16x128xf32>
    %59 = arith.minimumf %58, %57 : vector<16x128xf32>
    %60 = arith.select %19, %55, %59 : vector<16x128xi1>, vector<16x128xf32>
    %cst_19 = arith.constant 0.000000e+00 : f32
    %61 = vector.broadcast %cst_19 : f32 to vector<1x128xf32>
    %c16_i32_20 = arith.constant 16 : i32
    %62 = tpu.dynamic_rotate %60 by %c16_i32_20 dim 1 : vector<16x128xf32>, i32 -> vector<16x128xf32>
    %cst_21 = arith.constant 0.000000e+00 : f32
    %63 = vector.broadcast %cst_21 : f32 to vector<16x128xf32>
    %64 = arith.select %41, %62, %63 : vector<16x128xi1>, vector<16x128xf32>
    %c112_i32_22 = arith.constant 112 : i32
    %65 = tpu.dynamic_rotate %60 by %c112_i32_22 dim 1 : vector<16x128xf32>, i32 -> vector<16x128xf32>
    %cst_23 = arith.constant 0.000000e+00 : f32
    %66 = vector.broadcast %cst_23 : f32 to vector<16x128xf32>
    %67 = arith.select %43, %65, %66 : vector<16x128xi1>, vector<16x128xf32>
    %c0_24 = arith.constant 0 : index
    %c0_25 = arith.constant 0 : index
    %68 = vector.load %arg3[%c0_24, %c0_25] : memref<9x128xf32, #tpu.memory_space<vmem>>, vector<9x128xf32>
    %cst_26 = arith.constant 0.000000e+00 : f32
    %69 = vector.broadcast %cst_26 : f32 to vector<16x128xf32>
    %70 = vector.extract_strided_slice %64 {offsets = [0, 0], sizes = [15, 128], strides = [1, 1]} : vector<16x128xf32> to vector<15x128xf32>
    %71 = tpu.concatenate %61, %70 in 0 : vector<1x128xf32>, vector<15x128xf32> -> vector<16x128xf32>
    %cst_27 = arith.constant 0.000000e+00 : f32
    %72 = vector.broadcast %cst_27 : f32 to vector<16x128xf32>
    %73 = arith.select %37, %71, %72 : vector<16x128xi1>, vector<16x128xf32>
    %74 = vector.extract_strided_slice %68 {offsets = [0, 0], sizes = [1, 128], strides = [1, 1]} : vector<9x128xf32> to vector<1x128xf32>
    %75 = vector.broadcast %74 : vector<1x128xf32> to vector<16x128xf32>
    %76 = arith.mulf %73, %75 : vector<16x128xf32>
    %77 = arith.addf %69, %76 : vector<16x128xf32>
    %78 = vector.extract_strided_slice %60 {offsets = [0, 0], sizes = [15, 128], strides = [1, 1]} : vector<16x128xf32> to vector<15x128xf32>
    %79 = tpu.concatenate %61, %78 in 0 : vector<1x128xf32>, vector<15x128xf32> -> vector<16x128xf32>
    %cst_28 = arith.constant 0.000000e+00 : f32
    %80 = vector.broadcast %cst_28 : f32 to vector<16x128xf32>
    %81 = arith.select %37, %79, %80 : vector<16x128xi1>, vector<16x128xf32>
    %82 = vector.extract_strided_slice %68 {offsets = [1, 0], sizes = [1, 128], strides = [1, 1]} : vector<9x128xf32> to vector<1x128xf32>
    %83 = vector.broadcast %82 : vector<1x128xf32> to vector<16x128xf32>
    %84 = arith.mulf %81, %83 : vector<16x128xf32>
    %85 = arith.addf %77, %84 : vector<16x128xf32>
    %86 = vector.extract_strided_slice %67 {offsets = [0, 0], sizes = [15, 128], strides = [1, 1]} : vector<16x128xf32> to vector<15x128xf32>
    %87 = tpu.concatenate %61, %86 in 0 : vector<1x128xf32>, vector<15x128xf32> -> vector<16x128xf32>
    %cst_29 = arith.constant 0.000000e+00 : f32
    %88 = vector.broadcast %cst_29 : f32 to vector<16x128xf32>
    %89 = arith.select %37, %87, %88 : vector<16x128xi1>, vector<16x128xf32>
    %90 = vector.extract_strided_slice %68 {offsets = [2, 0], sizes = [1, 128], strides = [1, 1]} : vector<9x128xf32> to vector<1x128xf32>
    %91 = vector.broadcast %90 : vector<1x128xf32> to vector<16x128xf32>
    %92 = arith.mulf %89, %91 : vector<16x128xf32>
    %93 = arith.addf %85, %92 : vector<16x128xf32>
    %94 = vector.extract_strided_slice %68 {offsets = [3, 0], sizes = [1, 128], strides = [1, 1]} : vector<9x128xf32> to vector<1x128xf32>
    %95 = vector.broadcast %94 : vector<1x128xf32> to vector<16x128xf32>
    %96 = arith.mulf %64, %95 : vector<16x128xf32>
    %97 = arith.addf %93, %96 : vector<16x128xf32>
    %98 = vector.extract_strided_slice %68 {offsets = [4, 0], sizes = [1, 128], strides = [1, 1]} : vector<9x128xf32> to vector<1x128xf32>
    %99 = vector.broadcast %98 : vector<1x128xf32> to vector<16x128xf32>
    %100 = arith.mulf %60, %99 : vector<16x128xf32>
    %101 = arith.addf %97, %100 : vector<16x128xf32>
    %102 = vector.extract_strided_slice %68 {offsets = [5, 0], sizes = [1, 128], strides = [1, 1]} : vector<9x128xf32> to vector<1x128xf32>
    %103 = vector.broadcast %102 : vector<1x128xf32> to vector<16x128xf32>
    %104 = arith.mulf %67, %103 : vector<16x128xf32>
    %105 = arith.addf %101, %104 : vector<16x128xf32>
    %106 = vector.extract_strided_slice %64 {offsets = [1, 0], sizes = [15, 128], strides = [1, 1]} : vector<16x128xf32> to vector<15x128xf32>
    %107 = tpu.concatenate %106, %61 in 0 : vector<15x128xf32>, vector<1x128xf32> -> vector<16x128xf32>
    %cst_30 = arith.constant 0.000000e+00 : f32
    %108 = vector.broadcast %cst_30 : f32 to vector<16x128xf32>
    %109 = arith.select %39, %107, %108 : vector<16x128xi1>, vector<16x128xf32>
    %110 = vector.extract_strided_slice %68 {offsets = [6, 0], sizes = [1, 128], strides = [1, 1]} : vector<9x128xf32> to vector<1x128xf32>
    %111 = vector.broadcast %110 : vector<1x128xf32> to vector<16x128xf32>
    %112 = arith.mulf %109, %111 : vector<16x128xf32>
    %113 = arith.addf %105, %112 : vector<16x128xf32>
    %114 = vector.extract_strided_slice %60 {offsets = [1, 0], sizes = [15, 128], strides = [1, 1]} : vector<16x128xf32> to vector<15x128xf32>
    %115 = tpu.concatenate %114, %61 in 0 : vector<15x128xf32>, vector<1x128xf32> -> vector<16x128xf32>
    %cst_31 = arith.constant 0.000000e+00 : f32
    %116 = vector.broadcast %cst_31 : f32 to vector<16x128xf32>
    %117 = arith.select %39, %115, %116 : vector<16x128xi1>, vector<16x128xf32>
    %118 = vector.extract_strided_slice %68 {offsets = [7, 0], sizes = [1, 128], strides = [1, 1]} : vector<9x128xf32> to vector<1x128xf32>
    %119 = vector.broadcast %118 : vector<1x128xf32> to vector<16x128xf32>
    %120 = arith.mulf %117, %119 : vector<16x128xf32>
    %121 = arith.addf %113, %120 : vector<16x128xf32>
    %122 = vector.extract_strided_slice %67 {offsets = [1, 0], sizes = [15, 128], strides = [1, 1]} : vector<16x128xf32> to vector<15x128xf32>
    %123 = tpu.concatenate %122, %61 in 0 : vector<15x128xf32>, vector<1x128xf32> -> vector<16x128xf32>
    %cst_32 = arith.constant 0.000000e+00 : f32
    %124 = vector.broadcast %cst_32 : f32 to vector<16x128xf32>
    %125 = arith.select %39, %123, %124 : vector<16x128xi1>, vector<16x128xf32>
    %126 = vector.extract_strided_slice %68 {offsets = [8, 0], sizes = [1, 128], strides = [1, 1]} : vector<9x128xf32> to vector<1x128xf32>
    %127 = vector.broadcast %126 : vector<1x128xf32> to vector<16x128xf32>
    %128 = arith.mulf %125, %127 : vector<16x128xf32>
    %129 = arith.addf %121, %128 : vector<16x128xf32>
    %c0_33 = arith.constant 0 : index
    %c0_34 = arith.constant 0 : index
    %130 = vector.load %arg4[%c0_33, %c0_34] : memref<1x128xf32, #tpu.memory_space<vmem>>, vector<1x128xf32>
    %131 = vector.broadcast %130 : vector<1x128xf32> to vector<16x128xf32>
    %132 = arith.addf %129, %131 : vector<16x128xf32>
    %133 = arith.negf %132 : vector<16x128xf32>
    %134 = math.exp %133 : vector<16x128xf32>
    %cst_35 = arith.constant 1.000000e+00 : f32
    %135 = vector.broadcast %cst_35 : f32 to vector<16x128xf32>
    %136 = arith.addf %135, %134 : vector<16x128xf32>
    %137 = arith.divf %135, %136 : vector<16x128xf32>
    %138 = arith.mulf %132, %137 : vector<16x128xf32>
    %cst_36 = arith.constant 0.000000e+00 : f32
    %cst_37 = arith.constant 6.000000e+00 : f32
    %139 = vector.broadcast %cst_36 : f32 to vector<16x128xf32>
    %140 = arith.maximumf %139, %132 : vector<16x128xf32>
    %141 = vector.broadcast %cst_37 : f32 to vector<16x128xf32>
    %142 = arith.minimumf %141, %140 : vector<16x128xf32>
    %143 = arith.select %19, %138, %142 : vector<16x128xi1>, vector<16x128xf32>
    %144 = vector.extract_strided_slice %143 {offsets = [0, 0], sizes = [8, 128], strides = [1, 1]} : vector<16x128xf32> to vector<8x128xf32>
    %cst_38 = arith.constant dense<0.000000e+00> : vector<128xf32>
    %145 = vector.multi_reduction <add>, %144, %cst_38 [0] : vector<8x128xf32> to vector<128xf32>
    %146 = vector.shape_cast %145 : vector<128xf32> to vector<1x128xf32>
    %147 = vector.extract_strided_slice %143 {offsets = [8, 0], sizes = [8, 128], strides = [1, 1]} : vector<16x128xf32> to vector<8x128xf32>
    %cst_39 = arith.constant dense<0.000000e+00> : vector<128xf32>
    %148 = vector.multi_reduction <add>, %147, %cst_39 [0] : vector<8x128xf32> to vector<128xf32>
    %149 = vector.shape_cast %148 : vector<128xf32> to vector<1x128xf32>
    %150 = tpu.concatenate %146, %149 in 0 : vector<1x128xf32>, vector<1x128xf32> -> vector<2x128xf32>
    %151 = arith.truncf %150 : vector<2x128xf32> to vector<2x128xbf16>
    %c0_40 = arith.constant 0 : index
    %c0_41 = arith.constant 0 : index
    %152 = vector.load %arg5[%c0_40, %c0_41] : memref<128x256xbf16, #tpu.memory_space<vmem>>, vector<128x256xbf16>
    %cst_42 = arith.constant dense<0.000000e+00> : vector<2x256xf32>
    %153 = tpu.matmul %151, %152, %cst_42 {dimension_numbers = #tpu.dot_dimension_numbers<[1], [0], [0], [1], [0, 0, 1, 1], [], []>} : vector<2x128xbf16>, vector<128x256xbf16>, vector<2x256xf32> -> vector<2x256xf32>
    %c0_43 = arith.constant 0 : index
    %c0_44 = arith.constant 0 : index
    %154 = vector.load %arg6[%c0_43, %c0_44] : memref<1x256xf32, #tpu.memory_space<vmem>>, vector<1x256xf32>
    %155 = vector.broadcast %154 : vector<1x256xf32> to vector<2x256xf32>
    %156 = arith.addf %153, %155 : vector<2x256xf32>
    %157 = vector.extract_strided_slice %156 {offsets = [0, 0], sizes = [2, 128], strides = [1, 1]} : vector<2x256xf32> to vector<2x128xf32>
    %cst_45 = arith.constant dense<0xFF800000> : vector<2xf32>
    %158 = vector.multi_reduction <maximumf>, %157, %cst_45 [1] : vector<2x128xf32> to vector<2xf32>
    %159 = vector.shape_cast %158 : vector<2xf32> to vector<2x1xf32>
    %160 = vector.broadcast %159 : vector<2x1xf32> to vector<2x128xf32>
    %161 = arith.subf %157, %160 : vector<2x128xf32>
    %162 = math.exp %161 : vector<2x128xf32>
    %cst_46 = arith.constant dense<0.000000e+00> : vector<2xf32>
    %163 = vector.multi_reduction <add>, %162, %cst_46 [1] : vector<2x128xf32> to vector<2xf32>
    %164 = vector.shape_cast %163 : vector<2xf32> to vector<2x1xf32>
    %165 = tpu.reciprocal %164 {approx = true} : vector<2x1xf32> -> vector<2x1xf32>
    %166 = arith.mulf %164, %165 : vector<2x1xf32>
    %cst_47 = arith.constant 2.000000e+00 : f32
    %167 = vector.broadcast %cst_47 : f32 to vector<2x1xf32>
    %168 = arith.subf %167, %166 : vector<2x1xf32>
    %169 = arith.mulf %165, %168 : vector<2x1xf32>
    %170 = vector.broadcast %169 : vector<2x1xf32> to vector<2x128xf32>
    %171 = arith.mulf %162, %170 : vector<2x128xf32>
    %172 = vector.extract_strided_slice %156 {offsets = [0, 128], sizes = [2, 128], strides = [1, 1]} : vector<2x256xf32> to vector<2x128xf32>
    %cst_48 = arith.constant dense<0xFF800000> : vector<2xf32>
    %173 = vector.multi_reduction <maximumf>, %172, %cst_48 [1] : vector<2x128xf32> to vector<2xf32>
    %174 = vector.shape_cast %173 : vector<2xf32> to vector<2x1xf32>
    %175 = vector.broadcast %174 : vector<2x1xf32> to vector<2x128xf32>
    %176 = arith.subf %172, %175 : vector<2x128xf32>
    %177 = math.exp %176 : vector<2x128xf32>
    %cst_49 = arith.constant dense<0.000000e+00> : vector<2xf32>
    %178 = vector.multi_reduction <add>, %177, %cst_49 [1] : vector<2x128xf32> to vector<2xf32>
    %179 = vector.shape_cast %178 : vector<2xf32> to vector<2x1xf32>
    %180 = tpu.reciprocal %179 {approx = true} : vector<2x1xf32> -> vector<2x1xf32>
    %181 = arith.mulf %179, %180 : vector<2x1xf32>
    %cst_50 = arith.constant 2.000000e+00 : f32
    %182 = vector.broadcast %cst_50 : f32 to vector<2x1xf32>
    %183 = arith.subf %182, %181 : vector<2x1xf32>
    %184 = arith.mulf %180, %183 : vector<2x1xf32>
    %185 = vector.broadcast %184 : vector<2x1xf32> to vector<2x128xf32>
    %186 = arith.mulf %177, %185 : vector<2x128xf32>
    %187 = arith.addf %171, %186 : vector<2x128xf32>
    %cst_51 = arith.constant 5.000000e-01 : f32
    %188 = vector.broadcast %cst_51 : f32 to vector<2x128xf32>
    %189 = arith.mulf %187, %188 : vector<2x128xf32>
    %c0_52 = arith.constant 0 : index
    %c0_53 = arith.constant 0 : index
    %190 = vector.load %arg7[%c0_52, %c0_53] : memref<2x128xf32, #tpu.memory_space<vmem>>, vector<2x128xf32>
    tpu.vector_store %arg7[%c0_52, %c0_53], %189 {strides = array<i32>} : memref<2x128xf32, #tpu.memory_space<vmem>>, vector<2x128xf32>,
    return
  }
}

</mosaic_0001>

<llo_original>
// kernel: combined_model_forward.1
$region0: #{combined_model_forward.1}
  #allocation0 [shape = 'u32[]', space=smem, size = 0x4, offset = 0x4, fixed_abs, tag = 'smem constant byte address 0x4 - core index']
  #allocation1 [shape = 'u32[144,128]{1,0:T(1,128)}', space=vmem, size = 0x12000, scoped, tag = 'internal scratch']
  %s0 = inlined_call_operand.vmem [shape: bf16[16,216], index: 0, kind: input, shape index: {}]
  %s1 = inlined_call_operand.vmem [shape: bf16[216,128], index: 1, kind: input, shape index: {}]
  %s2 = inlined_call_operand.vmem [shape: f32[1,128], index: 2, kind: input, shape index: {}]
  %s3 = inlined_call_operand.vmem [shape: f32[9,128], index: 3, kind: input, shape index: {}]
  %s4 = inlined_call_operand.vmem [shape: f32[1,128], index: 4, kind: input, shape index: {}]
  %s5 = inlined_call_operand.vmem [shape: bf16[128,256], index: 5, kind: input, shape index: {}]
  %s6 = inlined_call_operand.vmem [shape: f32[1,256], index: 6, kind: input, shape index: {}]
  %s7 = inlined_call_operand.hbm [shape: f32[2,128], index: 7, kind: output, shape index: {}]
  %s8 = sld [smem:[#allocation0]]
  $region38: #{combined_model_forward.1} parent=0
    _
  %s10 = ssub.s32 1, %s8
  %s11 = scalar_select 0, %s10, %s8
  $region1: #{combined_model_forward.1} parent=0
    #allocation2 [shape = 'u8[1024]{0}', space=vmem, size = 0x400, scoped, tag = 'output window, operand 0, single buffered']
    #allocation3 [shape = 's32[1]{0}', space=sflag, size = 0x4, scoped, tag = 'scoped memory for combined_model_forward.1']
    %12 = vsyncpa [#allocation3], 0
    // Predicated region
    $region2: #{combined_model_forward.1} parent=1 // pred_check
      _
    $region3: #{combined_model_forward.1} parent=1 // pred_check_branch
      %14 = sbr.rel (0) target = $region5
    $region4: #{combined_model_forward.1} parent=1 // pred_region
      _
    $region5: #{combined_model_forward.1} parent=1 // pred_fallthru
      _
    // Predicated region
    $region6: #{combined_model_forward.1} parent=1 // pred_check
      _
    $region7: #{combined_model_forward.1} parent=1 // pred_check_branch
      %16 = sbr.rel (0) target = $region9
    $region8: #{combined_model_forward.1} parent=1 // pred_region
      _
    $region9: #{combined_model_forward.1} parent=1 // pred_fallthru
      _
    // Predicated region
    $region10: #{combined_model_forward.1} parent=1 // pred_check
      _
    $region11: #{combined_model_forward.1} parent=1 // pred_check_branch
      %18 = sbr.rel (0) target = $region13
    $region12: #{combined_model_forward.1} parent=1 // pred_region
      _
    $region13: #{combined_model_forward.1} parent=1 // pred_fallthru
      _
    // Predicated region
    $region14: #{combined_model_forward.1} parent=1 // pred_check
      _
    $region15: #{combined_model_forward.1} parent=1 // pred_check_branch
      %20 = sbr.rel (0) target = $region17
    $region16: #{combined_model_forward.1} parent=1 // pred_region
      _
    $region17: #{combined_model_forward.1} parent=1 // pred_fallthru
      _
    // Predicated region
    $region18: #{combined_model_forward.1} parent=1 // pred_check
      _
    $region19: #{combined_model_forward.1} parent=1 // pred_check_branch
      %22 = sbr.rel (0) target = $region21
    $region20: #{combined_model_forward.1} parent=1 // pred_region
      _
    $region21: #{combined_model_forward.1} parent=1 // pred_fallthru
      _
    // Predicated region
    $region22: #{combined_model_forward.1} parent=1 // pred_check
      _
    $region23: #{combined_model_forward.1} parent=1 // pred_check_branch
      %24 = sbr.rel (0) target = $region25
    $region24: #{combined_model_forward.1} parent=1 // pred_region
      _
    $region25: #{combined_model_forward.1} parent=1 // pred_fallthru
      _
    // Predicated region
    $region26: #{combined_model_forward.1} parent=1 // pred_check
      _
    $region27: #{combined_model_forward.1} parent=1 // pred_check_branch
      %26 = sbr.rel (0) target = $region29
    $region28: #{combined_model_forward.1} parent=1 // pred_region
      _
    $region29: #{combined_model_forward.1} parent=1 // pred_fallthru
      _
    %v28 = vlaneseq
    %v29 = vand.u32 %v28, 127
    %v30 = vlaneseq
    %v31 = vshrl.u32 %v30, 7
    %v32 = vadd.s32 %v31, 8
    %vm33 = vcmp.lt.s32.totalorder %v29, 0
    %v34 = vsub.s32 0, %v29
    %v35 = vsel %vm33, %v34, %v29
    %v36 = vshrl.u32 %v35, 4
    %v37 = vand.u32 %v35, 15
    %v38 = vsub.s32 0, %v37
    %v39 = vsel %vm33, %v38, %v37
    %vm40 = vcmp.ne.s32.totalorder %v39, 0
    %vm41 = vcmp.lt.s32.totalorder %v39, 0
    %vm42 = vmand %vm41, %vm40
    %v43 = vadd.s32 %v39, 16
    %v44 = vsel %vm42, %v43, %v39
    %vm45 = vcmp.lt.s32.totalorder %v44, 8
    %vm46 = vcmp.lt.s32.totalorder %v31, 0
    %v47 = vsub.s32 0, %v31
    %v48 = vsel %vm46, %v47, %v31
    %v49 = vshrl.u32 %v48, 3
    %v50 = vand.u32 %v48, 7
    %v51 = vsub.s32 0, %v50
    %v52 = vsel %vm46, %v51, %v50
    %vm53 = vcmp.lt.s32.totalorder %v32, 0
    %v54 = vsub.s32 0, %v32
    %v55 = vsel %vm53, %v54, %v32
    %v56 = vshrl.u32 %v55, 3
    %v57 = vand.u32 %v55, 7
    %v58 = vsub.s32 0, %v57
    %v59 = vsel %vm53, %v58, %v57
    %vm60 = vcmp.ne.s32.totalorder %v52, 0
    %vm61 = vcmp.ne.s32.totalorder %v59, 0
    %vm62 = vcmp.lt.s32.totalorder %v52, 0
    %vm63 = vcmp.lt.s32.totalorder %v59, 0
    %vm64 = vmand %vm62, %vm60
    %vm65 = vmand %vm63, %vm61
    %v66 = vadd.s32 %v52, 8
    %v67 = vadd.s32 %v59, 8
    %v68 = vsel %vm64, %v66, %v52
    %v69 = vsel %vm65, %v67, %v59
    %vm70 = vcmp.ge.s32.totalorder %v68, 1
    %vm71 = vcmp.ge.s32.totalorder %v69, 1
    %vm72 = vcmp.le.s32.totalorder %v68, 6
    %vm73 = vcmp.le.s32.totalorder %v69, 6
    %vm74 = vcmp.ge.s32.totalorder %v29, 16
    %vm75 = vcmp.lt.s32.totalorder %v29, 112
    %v76 = vld [vmem:[%s0] sm:$0xff]
    %v77 = vld [vmem:[%s0 + $0x8] sm:$0xff]
    %v78 = vld [vmem:[%s1] sm:$0xf]
    %v79 = vld [vmem:[%s1 + $0x4] sm:$0xf]
    %v80 = vld [vmem:[%s1 + $0x8] sm:$0xf]
    %v81 = vld [vmem:[%s1 + $0xc] sm:$0xf]
    %v82 = vld [vmem:[%s1 + $0x10] sm:$0xf]
    %v83 = vld [vmem:[%s1 + $0x14] sm:$0xf]
    %v84 = vld [vmem:[%s1 + $0x18] sm:$0xf]
    %v85 = vld [vmem:[%s1 + $0x1c] sm:$0xf]
    %v86 = vld [vmem:[%s1 + $0x20] sm:$0xf]
    %v87 = vld [vmem:[%s1 + $0x24] sm:$0xf]
    %v88 = vld [vmem:[%s1 + $0x28] sm:$0xf]
    %v89 = vld [vmem:[%s1 + $0x2c] sm:$0xf]
    %v90 = vld [vmem:[%s1 + $0x30] sm:$0xf]
    %v91 = vld [vmem:[%s1 + $0x34] sm:$0xf]
    %v92 = vld [vmem:[%s1 + $0x38] sm:$0xf]
    %v93 = vld [vmem:[%s1 + $0x3c] sm:$0xf]
    %v94 = vld [vmem:[%s1 + $0x40] sm:$0xf]
    %v95 = vld [vmem:[%s1 + $0x44] sm:$0xf]
    %v96 = vld [vmem:[%s1 + $0x48] sm:$0xf]
    %v97 = vld [vmem:[%s1 + $0x4c] sm:$0xf]
    %v98 = vld [vmem:[%s1 + $0x50] sm:$0xf]
    %v99 = vld [vmem:[%s1 + $0x54] sm:$0xf]
    %v100 = vld [vmem:[%s1 + $0x58] sm:$0xf]
    %v101 = vld [vmem:[%s1 + $0x5c] sm:$0xf]
    %v102 = vld [vmem:[%s1 + $0x60] sm:$0xf]
    %v103 = vld [vmem:[%s1 + $0x64] sm:$0xf]
    %v104 = vld [vmem:[%s1 + $0x68] sm:$0xf]
    %v105 = vld [vmem:[%s2] sm:$0x1]
    %v107 = vlaneseq
    %v108 = vshrl.u32 %v107, 7
    %v109 = vsub.s32 0, %v108
    %v110 = vrot.slane %v105, %v109
    %v114 = vunpack.c.l.b16 %v76
    %v115 = vunpack.c.h.b16 %v76
    %v116 = vunpack.c.l.b16 %v77
    %v117 = vunpack.c.h.b16 %v77
    %v118 = vpack.c.b16 %v116, %v114
    %v119 = vpack.c.b16 %v117, %v115
    %v148 = vunpack.c.l.b16 %v78
    %v149 = vunpack.c.l.b16 %v79
    %v150 = vunpack.c.l.b16 %v80
    %v151 = vunpack.c.l.b16 %v81
    %v152 = vunpack.c.l.b16 %v82
    %v153 = vunpack.c.l.b16 %v83
    %v154 = vunpack.c.l.b16 %v84
    %v155 = vunpack.c.l.b16 %v85
    %v156 = vunpack.c.l.b16 %v86
    %v157 = vunpack.c.l.b16 %v87
    %v158 = vunpack.c.l.b16 %v88
    %v159 = vunpack.c.l.b16 %v89
    %v160 = vunpack.c.l.b16 %v90
    %v161 = vunpack.c.l.b16 %v91
    %v162 = vunpack.c.l.b16 %v92
    %v163 = vunpack.c.l.b16 %v93
    %v164 = vunpack.c.l.b16 %v94
    %v165 = vunpack.c.l.b16 %v95
    %v166 = vunpack.c.l.b16 %v96
    %v167 = vunpack.c.l.b16 %v97
    %v168 = vunpack.c.l.b16 %v98
    %v169 = vunpack.c.l.b16 %v99
    %v170 = vunpack.c.l.b16 %v100
    %v171 = vunpack.c.l.b16 %v101
    %v172 = vunpack.c.l.b16 %v102
    %v173 = vunpack.c.l.b16 %v103
    %v174 = vunpack.c.l.b16 %v104
    %v175 = vpack.c.b16 %v149, %v148
    %v176 = vpack.c.b16 %v151, %v150
    %v177 = vpack.c.b16 %v153, %v152
    %v178 = vpack.c.b16 %v155, %v154
    %v179 = vpack.c.b16 %v157, %v156
    %v180 = vpack.c.b16 %v159, %v158
    %v181 = vpack.c.b16 %v161, %v160
    %v182 = vpack.c.b16 %v163, %v162
    %v183 = vpack.c.b16 %v165, %v164
    %v184 = vpack.c.b16 %v167, %v166
    %v185 = vpack.c.b16 %v169, %v168
    %v186 = vpack.c.b16 %v171, %v170
    %v187 = vpack.c.b16 %v173, %v172
    %v188 = vpack.c.b16 %v174, %v174
    %vm202 = vcmask 719872
    %v204 = vsel %vm202, %v119, 0
    %vm206 = vcmask 1043456
    %v208 = vsel %vm206, %v188, 0
    %210 = vmatprep.subr.bf16.mxu0 0
    %211 = vmatpush1.bf16.msra.mxu0 %v175
    %212 = vmatprep.subr.bf16.mxu0 0
    %213 = vmatpush1.bf16.msra.mxu0 %v176
    %214 = vmatprep.subr.bf16.mxu0 0
    %215 = vmatpush1.bf16.msra.mxu0 %v177
    %216 = vmatprep.subr.bf16.mxu0 0
    %217 = vmatpush1.bf16.msra.mxu0 %v178
    %218 = vmatprep.subr.bf16.mxu0 0
    %219 = vmatpush1.bf16.msra.mxu0 %v179
    %220 = vmatprep.subr.bf16.mxu0 0
    %221 = vmatpush1.bf16.msra.mxu0 %v180
    %222 = vmatprep.subr.bf16.mxu0 0
    %223 = vmatpush1.bf16.msra.mxu0 %v181
    %224 = vmatprep.subr.bf16.mxu0 0
    %225 = vmatpush1.bf16.msra.mxu0 %v182
    %226 = vmatprep.subr.bf16.mxu0 0
    %227 = vmatpush1.bf16.msra.mxu0 %v183
    %228 = vmatprep.subr.bf16.mxu0 0
    %229 = vmatpush1.bf16.msra.mxu0 %v184
    %230 = vmatprep.subr.bf16.mxu0 0
    %231 = vmatpush1.bf16.msra.mxu0 %v185
    %232 = vmatprep.subr.bf16.mxu0 0
    %233 = vmatpush1.bf16.msra.mxu0 %v186
    %234 = vmatprep.subr.bf16.mxu0 0
    %235 = vmatpush1.bf16.msra.mxu0 %v187
    %236 = vmatprep.subr.bf16.mxu0 0
    %237 = vmatpush1.bf16.msra.mxu0 %v208
    %238 = vmatprep.subr.bf16.mxu0 0
    %239 = vmatpush1.bf16.msra.mxu0 0
    %240 = vmatprep.subr.bf16.mxu0 0
    %241 = vmatpush1.bf16.msra.mxu0 0
    %242 = vmatprep.mubr.bf16.mxu0 %v204
    %243 = vmatmul.mubr.bf16.gmra.mrb[0].mxu0 %v118
    %v244 = vpop.f32.mrb[0].mxu0
    %v245 = vadd.f32 %v110, %v244
    %v246 = vpop.f32.mrb[0].mxu0
    %v247 = vpop.f32.mrb[0].mxu0
    %v248 = vadd.f32 %v110, %v247
    %v249 = vpop.f32.mrb[0].mxu0
    %250 = vdwg.mxu0
    %v251 = vxor.u32 %v245, 2147483648
    %v252 = vxor.u32 %v248, 2147483648
    %v253 = vmul.f32 %v251, 1.442695
    %v254 = vpow.pop %v253
    %v255 = vmul.f32 %v252, 1.442695
    %v256 = vpow.pop %v255
    %v257 = vadd.f32 %v254, 1.0
    %v258 = vadd.f32 %v256, 1.0
    %v259 = vrcp.pop %v257
    %v260 = vmul.f32 1.0, %v259
    %v261 = vrcp.pop %v258
    %v262 = vmul.f32 1.0, %v261
    %v263 = vmul.f32 %v245, %v260
    %v264 = vmul.f32 %v248, %v262
    %v265 = vmax.f32 %v245, 0.0
    %v266 = vmax.f32 %v248, 0.0
    %v267 = vmin.f32 %v265, 6.0
    %v268 = vmin.f32 %v266, 6.0
    %v269 = vsel %vm45, %v263, %v267
    %v270 = vsel %vm45, %v264, %v268
    %271 = vrot.lane.b32.xlu0 %v269, 16
    %v272 = vpop.permute.xlu0 %271
    %273 = vrot.lane.b32.xlu0 %v270, 16
    %v274 = vpop.permute.xlu0 %273
    %v275 = vsel %vm74, %v272, 0.0
    %v276 = vsel %vm74, %v274, 0.0
    %277 = vrot.lane.b32.xlu0 %v269, 112
    %v278 = vpop.permute.xlu0 %277
    %279 = vrot.lane.b32.xlu0 %v270, 112
    %v280 = vpop.permute.xlu0 %279
    %v281 = vsel %vm75, %v278, 0.0
    %v282 = vsel %vm75, %v280, 0.0
    %v283 = vld [vmem:[%s3] sm:$0xff]
    %v284 = vld [vmem:[%s3 + $0x8] sm:$0x1]
    %vm287 = vcmask 1040384
    %v288 = vrot.slane %v275, 7
    %v289 = vrot.slane %v276, 7
    %v290 = vsel %vm287, %v288, %v289
    %v293 = vsel %vm287, 0.0, %v288
    %v294 = vsel %vm70, %v293, 0.0
    %v295 = vsel %vm71, %v290, 0.0
    %v296 = vlaneseq
    %v297 = vshrl.u32 %v296, 7
    %v298 = vsub.s32 0, %v297
    %v299 = vrot.slane %v283, %v298
    %v300 = vmul.f32 %v294, %v299
    %v301 = vmul.f32 %v295, %v299
    %v302 = vadd.f32 %v300, 0.0
    %v303 = vadd.f32 %v301, 0.0
    %v306 = vrot.slane %v269, 7
    %v307 = vrot.slane %v270, 7
    %v308 = vsel %vm287, %v306, %v307
    %v311 = vsel %vm287, 0.0, %v306
    %v312 = vsel %vm70, %v311, 0.0
    %v313 = vsel %vm71, %v308, 0.0
    %v314 = vlaneseq
    %v315 = vshrl.u32 %v314, 7
    %v316 = vsub.s32 1, %v315
    %v317 = vrot.slane %v283, %v316
    %v318 = vmul.f32 %v312, %v317
    %v319 = vmul.f32 %v313, %v317
    %v320 = vadd.f32 %v302, %v318
    %v321 = vadd.f32 %v303, %v319
    %v324 = vrot.slane %v281, 7
    %v325 = vrot.slane %v282, 7
    %v326 = vsel %vm287, %v324, %v325
    %v329 = vsel %vm287, 0.0, %v324
    %v330 = vsel %vm70, %v329, 0.0
    %v331 = vsel %vm71, %v326, 0.0
    %v332 = vlaneseq
    %v333 = vshrl.u32 %v332, 7
    %v334 = vsub.s32 2, %v333
    %v335 = vrot.slane %v283, %v334
    %v336 = vmul.f32 %v330, %v335
    %v337 = vmul.f32 %v331, %v335
    %v338 = vadd.f32 %v320, %v336
    %v339 = vadd.f32 %v321, %v337
    %v340 = vlaneseq
    %v341 = vshrl.u32 %v340, 7
    %v342 = vsub.s32 3, %v341
    %v343 = vrot.slane %v283, %v342
    %v344 = vmul.f32 %v275, %v343
    %v345 = vmul.f32 %v276, %v343
    %v346 = vadd.f32 %v338, %v344
    %v347 = vadd.f32 %v339, %v345
    %v348 = vlaneseq
    %v349 = vshrl.u32 %v348, 7
    %v350 = vsub.s32 4, %v349
    %v351 = vrot.slane %v283, %v350
    %v352 = vmul.f32 %v269, %v351
    %v353 = vmul.f32 %v270, %v351
    %v354 = vadd.f32 %v346, %v352
    %v355 = vadd.f32 %v347, %v353
    %v356 = vlaneseq
    %v357 = vshrl.u32 %v356, 7
    %v358 = vsub.s32 5, %v357
    %v359 = vrot.slane %v283, %v358
    %v360 = vmul.f32 %v281, %v359
    %v361 = vmul.f32 %v282, %v359
    %v362 = vadd.f32 %v354, %v360
    %v363 = vadd.f32 %v355, %v361
    %vm364 = vcmask 1046528
    %v365 = vrot.slane %v275, 1
    %v366 = vrot.slane %v276, 1
    %v367 = vsel %vm364, %v365, %v366
    %v370 = vsel %vm364, %v366, 0.0
    %v371 = vsel %vm72, %v367, 0.0
    %v372 = vsel %vm73, %v370, 0.0
    %v373 = vlaneseq
    %v374 = vshrl.u32 %v373, 7
    %v375 = vsub.s32 6, %v374
    %v376 = vrot.slane %v283, %v375
    %v377 = vmul.f32 %v371, %v376
    %v378 = vmul.f32 %v372, %v376
    %v379 = vadd.f32 %v362, %v377
    %v380 = vadd.f32 %v363, %v378
    %v381 = vrot.slane %v269, 1
    %v382 = vrot.slane %v270, 1
    %v383 = vsel %vm364, %v381, %v382
    %v386 = vsel %vm364, %v382, 0.0
    %v387 = vsel %vm72, %v383, 0.0
    %v388 = vsel %vm73, %v386, 0.0
    %v389 = vlaneseq
    %v390 = vshrl.u32 %v389, 7
    %v391 = vsub.s32 7, %v390
    %v392 = vrot.slane %v283, %v391
    %v393 = vmul.f32 %v387, %v392
    %v394 = vmul.f32 %v388, %v392
    %v395 = vadd.f32 %v379, %v393
    %v396 = vadd.f32 %v380, %v394
    %v397 = vrot.slane %v281, 1
    %v398 = vrot.slane %v282, 1
    %v399 = vsel %vm364, %v397, %v398
    %v402 = vsel %vm364, %v398, 0.0
    %v403 = vsel %vm72, %v399, 0.0
    %v404 = vsel %vm73, %v402, 0.0
    %v405 = vlaneseq
    %v406 = vshrl.u32 %v405, 7
    %v407 = vsub.s32 0, %v406
    %v408 = vrot.slane %v284, %v407
    %v409 = vmul.f32 %v403, %v408
    %v410 = vmul.f32 %v404, %v408
    %v411 = vadd.f32 %v395, %v409
    %v412 = vadd.f32 %v396, %v410
    %v413 = vld [vmem:[%s4] sm:$0x1]
    %v415 = vlaneseq
    %v416 = vshrl.u32 %v415, 7
    %v417 = vsub.s32 0, %v416
    %v418 = vrot.slane %v413, %v417
    %v420 = vadd.f32 %v411, %v418
    %v421 = vadd.f32 %v412, %v418
    %v422 = vxor.u32 %v420, 2147483648
    %v423 = vxor.u32 %v421, 2147483648
    %v424 = vmul.f32 %v422, 1.442695
    %v425 = vpow.pop %v424
    %v426 = vmul.f32 %v423, 1.442695
    %v427 = vpow.pop %v426
    %v428 = vadd.f32 %v425, 1.0
    %v429 = vadd.f32 %v427, 1.0
    %v430 = vrcp.pop %v428
    %v431 = vmul.f32 1.0, %v430
    %v432 = vrcp.pop %v429
    %v433 = vmul.f32 1.0, %v432
    %v434 = vmul.f32 %v420, %v431
    %v435 = vmul.f32 %v421, %v433
    %v436 = vmax.f32 %v420, 0.0
    %v437 = vmax.f32 %v421, 0.0
    %v438 = vmin.f32 %v436, 6.0
    %v439 = vmin.f32 %v437, 6.0
    %v440 = vsel %vm45, %v434, %v438
    %v441 = vsel %vm45, %v435, %v439
    %v442 = vrot.slane %v440, 4
    %v443 = vadd.f32 %v440, %v442
    %v444 = vrot.slane %v443, 2
    %v445 = vadd.f32 %v443, %v444
    %v446 = vrot.slane %v445, 1
    %v447 = vadd.f32 %v445, %v446
    %v448 = vrot.slane %v441, 4
    %v449 = vadd.f32 %v441, %v448
    %v450 = vrot.slane %v449, 2
    %v451 = vadd.f32 %v449, %v450
    %v452 = vrot.slane %v451, 1
    %v453 = vadd.f32 %v451, %v452
    %v454 = vsel %vm287, %v447, %v453
    %v455 = vpack.c.bf16 %v454, %v454
    %v456 = vld [vmem:[%s5] sm:$0xff]
    %v457 = vld [vmem:[%s5 + $0x8] sm:$0xff]
    %v458 = vld [vmem:[%s5 + $0x10] sm:$0xff]
    %v459 = vld [vmem:[%s5 + $0x18] sm:$0xff]
    %v460 = vld [vmem:[%s5 + $0x20] sm:$0xff]
    %v461 = vld [vmem:[%s5 + $0x28] sm:$0xff]
    %v462 = vld [vmem:[%s5 + $0x30] sm:$0xff]
    %v463 = vld [vmem:[%s5 + $0x38] sm:$0xff]
    %v464 = vld [vmem:[%s5 + $0x40] sm:$0xff]
    %v465 = vld [vmem:[%s5 + $0x48] sm:$0xff]
    %v466 = vld [vmem:[%s5 + $0x50] sm:$0xff]
    %v467 = vld [vmem:[%s5 + $0x58] sm:$0xff]
    %v468 = vld [vmem:[%s5 + $0x60] sm:$0xff]
    %v469 = vld [vmem:[%s5 + $0x68] sm:$0xff]
    %v470 = vld [vmem:[%s5 + $0x70] sm:$0xff]
    %v471 = vld [vmem:[%s5 + $0x78] sm:$0xff]
    %v472 = vld [vmem:[%s6] sm:$0x3]
    %v474 = vlaneseq
    %v475 = vshrl.u32 %v474, 7
    %v476 = vsub.s32 0, %v475
    %v477 = vrot.slane %v472, %v476
    %v478 = vlaneseq
    %v479 = vshrl.u32 %v478, 7
    %v480 = vsub.s32 1, %v479
    %v481 = vrot.slane %v472, %v480
    %v500 = vunpack.c.l.b16 %v456
    %v501 = vunpack.c.h.b16 %v456
    %v502 = vunpack.c.l.b16 %v457
    %v503 = vunpack.c.h.b16 %v457
    %v504 = vunpack.c.l.b16 %v458
    %v505 = vunpack.c.h.b16 %v458
    %v506 = vunpack.c.l.b16 %v459
    %v507 = vunpack.c.h.b16 %v459
    %v508 = vunpack.c.l.b16 %v460
    %v509 = vunpack.c.h.b16 %v460
    %v510 = vunpack.c.l.b16 %v461
    %v511 = vunpack.c.h.b16 %v461
    %v512 = vunpack.c.l.b16 %v462
    %v513 = vunpack.c.h.b16 %v462
    %v514 = vunpack.c.l.b16 %v463
    %v515 = vunpack.c.h.b16 %v463
    %v516 = vunpack.c.l.b16 %v464
    %v517 = vunpack.c.h.b16 %v464
    %v518 = vunpack.c.l.b16 %v465
    %v519 = vunpack.c.h.b16 %v465
    %v520 = vunpack.c.l.b16 %v466
    %v521 = vunpack.c.h.b16 %v466
    %v522 = vunpack.c.l.b16 %v467
    %v523 = vunpack.c.h.b16 %v467
    %v524 = vunpack.c.l.b16 %v468
    %v525 = vunpack.c.h.b16 %v468
    %v526 = vunpack.c.l.b16 %v469
    %v527 = vunpack.c.h.b16 %v469
    %v528 = vunpack.c.l.b16 %v470
    %v529 = vunpack.c.h.b16 %v470
    %v530 = vunpack.c.l.b16 %v471
    %v531 = vunpack.c.h.b16 %v471
    %v532 = vpack.c.b16 %v502, %v500
    %v533 = vpack.c.b16 %v503, %v501
    %v534 = vpack.c.b16 %v506, %v504
    %v535 = vpack.c.b16 %v507, %v505
    %v536 = vpack.c.b16 %v510, %v508
    %v537 = vpack.c.b16 %v511, %v509
    %v538 = vpack.c.b16 %v514, %v512
    %v539 = vpack.c.b16 %v515, %v513
    %v540 = vpack.c.b16 %v518, %v516
    %v541 = vpack.c.b16 %v519, %v517
    %v542 = vpack.c.b16 %v522, %v520
    %v543 = vpack.c.b16 %v523, %v521
    %v544 = vpack.c.b16 %v526, %v524
    %v545 = vpack.c.b16 %v527, %v525
    %v546 = vpack.c.b16 %v530, %v528
    %v547 = vpack.c.b16 %v531, %v529
    %564 = vmatprep.subr.bf16.mxu0 %v533
    %565 = vmatpush1.bf16.msra.mxu0 %v532
    %566 = vmatprep.subr.bf16.mxu0 %v535
    %567 = vmatpush1.bf16.msra.mxu0 %v534
    %568 = vmatprep.subr.bf16.mxu0 %v537
    %569 = vmatpush1.bf16.msra.mxu0 %v536
    %570 = vmatprep.subr.bf16.mxu0 %v539
    %571 = vmatpush1.bf16.msra.mxu0 %v538
    %572 = vmatprep.subr.bf16.mxu0 %v541
    %573 = vmatpush1.bf16.msra.mxu0 %v540
    %574 = vmatprep.subr.bf16.mxu0 %v543
    %575 = vmatpush1.bf16.msra.mxu0 %v542
    %576 = vmatprep.subr.bf16.mxu0 %v545
    %577 = vmatpush1.bf16.msra.mxu0 %v544
    %578 = vmatprep.subr.bf16.mxu0 %v547
    %579 = vmatpush1.bf16.msra.mxu0 %v546
    %580 = vmatprep.subr.bf16.mxu0 0
    %581 = vmatpush1.bf16.msra.mxu0 0
    %582 = vmatprep.subr.bf16.mxu0 0
    %583 = vmatpush1.bf16.msra.mxu0 0
    %584 = vmatprep.subr.bf16.mxu0 0
    %585 = vmatpush1.bf16.msra.mxu0 0
    %586 = vmatprep.subr.bf16.mxu0 0
    %587 = vmatpush1.bf16.msra.mxu0 0
    %588 = vmatprep.subr.bf16.mxu0 0
    %589 = vmatpush1.bf16.msra.mxu0 0
    %590 = vmatprep.subr.bf16.mxu0 0
    %591 = vmatpush1.bf16.msra.mxu0 0
    %592 = vmatprep.subr.bf16.mxu0 0
    %593 = vmatpush1.bf16.msra.mxu0 0
    %594 = vmatprep.subr.bf16.mxu0 0
    %595 = vmatpush1.bf16.msra.mxu0 0
    %596 = vmatprep.mubr.bf16.mxu0 0
    %597 = vmatmul.mubr.bf16.gmra.mrb[0].mxu0 %v455
    %v598 = vpop.f32.mrb[0].mxu0
    %v599 = vadd.f32 %v477, %v598
    %v600 = vpop.f32.mrb[0].mxu0
    %v601 = vadd.f32 %v481, %v600
    %v602 = vpop.f32.mrb[0].mxu0
    %v603 = vpop.f32.mrb[0].mxu0
    %604 = vdwg.mxu0
    %vm605 = vcmask 1041408
    %v606 = vsel %vm605, %v599, -inf
    %607 = vmax.xlane.f32.xlu0 %v606
    %v608 = vpop.xlane.xlu0 %607
    %v609 = vsub.f32 %v599, %v608
    %v610 = vmul.f32 %v609, 1.442695
    %v611 = vpow.pop %v610
    %v612 = vsel %vm605, %v611, 0.0
    %613 = vadd.xlane.f32.xlu0 %v612
    %v614 = vpop.xlane.xlu0 %613
    %v615 = vrcp.pop %v614
    %v616 = vmul.f32 %v614, %v615
    %v617 = vsub.f32 2.0, %v616
    %v618 = vmul.f32 %v615, %v617
    %v619 = vmul.f32 %v611, %v618
    %v620 = vsel %vm605, %v601, -inf
    %621 = vmax.xlane.f32.xlu0 %v620
    %v622 = vpop.xlane.xlu0 %621
    %v623 = vsub.f32 %v601, %v622
    %v624 = vmul.f32 %v623, 1.442695
    %v625 = vpow.pop %v624
    %v626 = vsel %vm605, %v625, 0.0
    %627 = vadd.xlane.f32.xlu0 %v626
    %v628 = vpop.xlane.xlu0 %627
    %v629 = vrcp.pop %v628
    %v630 = vmul.f32 %v628, %v629
    %v631 = vsub.f32 2.0, %v630
    %v632 = vmul.f32 %v629, %v631
    %v633 = vmul.f32 %v625, %v632
    %v634 = vadd.f32 %v619, %v633
    %v635 = vmul.f32 %v634, 0.5
    %636 = vst [vmem:[#allocation2] sm:$0x3] %v635
    // Predicated region
    $region30: #{combined_model_forward.1} parent=1 // pred_check
      _
    $region31: #{combined_model_forward.1} parent=1 // pred_check_branch
      %638 = sbr.rel (0) target = $region33
    $region32: #{combined_model_forward.1} parent=1 // pred_region
      %s640 = ssub.s32 32, 32
      %641 = vsyncadd [#allocation3], %s640
      %s643 = sshll.u32 [#allocation2], 4
      %s644 = int_to_ptr.vmem [resolvable:$true] %s643
      %646 = dma.vmem_to_hbm [thread:$0]  %s644, 32, %s7, [#allocation3]
    $region33: #{combined_model_forward.1} parent=1 // pred_fallthru
      _
    // Predicated region
    $region34: #{combined_model_forward.1} parent=1 // pred_check
      _
    $region35: #{combined_model_forward.1} parent=1 // pred_check_branch
      %648 = sbr.rel (0) target = $region37
    $region36: #{combined_model_forward.1} parent=1 // pred_region
      %649 = dma.done [#allocation3], 32
    $region37: #{combined_model_forward.1} parent=1 // pred_fallthru
      _
    %650 = vsyncpa [#allocation3], 1

</llo_original>
